<compile_context>
chip_gen: v7x
topology: tpu7x:2x2x1
jax: 0.10.0
libtpu: 0.0.40
codegen_flags: <defaults>
</compile_context>

<pallas_src>
import functools

import jax
import jax.numpy as jnp
from jax.experimental import pallas as pl
from jax.experimental.pallas import tpu as pltpu

_LANES = 128
_MIB = 1024 * 1024


def _round_up(v, m):
    return -(-v // m) * m


def _head_softmax_agg_kernel(x_ref, w_ref, b_ref, logits_ref, agg_ref, *,
                             n_frames, inv_n, num_classes):
    """One grid step handles `tb` albums (= tb * n_frames frame rows).

    x_ref:      (tb*N, F)   frame features
    w_ref:      (F, CP)     head weight, class dim zero-padded to 128 lanes
    b_ref:      (1, CP)     head bias, padded lanes carry -1e30
    logits_ref: (tb*N, C)   per-frame logits (un-padded class dim in HBM)
    agg_ref:    (tb, C)     per-album mean of per-frame softmax
    """
    x = x_ref[...]
    w = w_ref[...]
    b = b_ref[...]

    # Linear head on the MXU, f32 accumulation; compute stays 128-lane padded.
    logits = jnp.dot(x, w, preferred_element_type=jnp.float32) + b   # (rows, CP)

    # Only the real C class lanes go to HBM (masked store, but the output DMA
    # moves ~C/128 of the padded version and this kernel is HBM-bound).
    logits_ref[...] = logits[:, :num_classes].astype(logits_ref.dtype)

    # Softmax over classes. Padded lanes hold -1e30 so exp() underflows to 0
    # and they do not perturb the real-class normalization.
    m = jnp.max(logits, axis=-1, keepdims=True)
    e = jnp.exp(logits - m)
    s = jnp.sum(e, axis=-1, keepdims=True)
    sm = e * pl.reciprocal(s, approx=False)        # exact: keeps 1e-5 tolerance

    # Clip mean: (rows, CP) -> (tb, N, CP) -> sum over N, scaled by 1/N.
    # Second-order cost given this kernel's huge compute slack; cleanest when
    # N % 8 == 0 (no sublane relayout).
    tb = agg_ref.shape[0]
    sm3 = sm.reshape(tb, n_frames, sm.shape[-1])
    agg = jnp.sum(sm3, axis=1) * inv_n             # (tb, CP)
    agg_ref[...] = agg[:, :num_classes].astype(agg_ref.dtype)


def _vmem_limit_bytes():
    """Generation-aware scoped-VMEM limit (~48 MiB on v7x, ~96 MiB on v5e/v6e)."""
    try:
        info = pltpu.get_tpu_info()
        cap = int(getattr(info, "vmem_capacity_bytes", 64 * _MIB))
    except Exception:
        cap = 64 * _MIB          # most conservative physical VMEM (v7x per-core)
    return max(32 * _MIB, min((cap * 3) // 4, 96 * _MIB))


def _choose_albums_per_step(B, N, F, CP, tile_budget_bytes):
    """Pick albums-per-step from a VMEM budget (f32 everywhere)."""
    # Per-album (N frame rows) VMEM bytes:
    #   2x double-buffered x tile + 2x double-buffered logits-out tile
    #   (lane-padded to CP inside VMEM) + ~2 softmax-sized temporaries.
    per_album = 4 * N * (2 * F + 4 * CP)
    fixed = 4 * (2 * F * CP + 2 * CP)       # resident (double-buffered) W, bias
    cap = max((tile_budget_bytes - fixed) // max(per_album, 1), 1)
    target = max(-(-2048 // N), 1)          # aim for >= ~2048 frame rows / step
    tb = max(min(target, cap), 1)
    tb = max((tb // 8) * 8, 8)              # sublane-aligned album count
    if B <= tb:
        if B >= 16:
            # Keep >= 2 grid steps so both TensorCores get work on v7x.
            tb = _round_up(-(-B // 2), 8)
        else:
            tb = B                          # single full-batch block (tiny B)
    return tb


def ftresnet_forward(x, w, b, *, albums_per_step=None):
    """x: (B, N, F) f32, w: (F, C), b: (C,).

    Returns (agg_logits (B, C), frame_logits (B, N, C)).
    """
    B, N, F = x.shape
    C = w.shape[1]

    # Class dim padded to one lane group *for compute only*; HBM outputs stay
    # at the real C. Padded bias lanes get -1e30 so softmax yields exactly 0.
    CP = _round_up(C, _LANES)
    w_p = jnp.zeros((F, CP), jnp.float32).at[:, :C].set(w.astype(jnp.float32))
    b_p = jnp.full((1, CP), -1e30, jnp.float32).at[0, :C].set(b.astype(jnp.float32))

    vmem_limit = _vmem_limit_bytes()
    if albums_per_step is None:
        tb = _choose_albums_per_step(B, N, F, CP, (vmem_limit * 3) // 5)
    else:
        tb = max(min(int(albums_per_step), B), 1)
        if tb < B:
            tb = min(_round_up(tb, 8), B)   # keep blocks sublane-aligned
    rows = tb * N
    grid = (pl.cdiv(B, tb),)   # last block may be ragged; OOB writes are dropped

    x2 = x.reshape(B * N, F)   # contiguous reshape: no HBM copy

    kernel = functools.partial(_head_softmax_agg_kernel,
                               n_frames=N, inv_n=1.0 / N, num_classes=C)

    frame_logits2, agg_logits = pl.pallas_call(
        kernel,
        out_shape=(
            jax.ShapeDtypeStruct((B * N, C), jnp.float32),  # per-frame logits
            jax.ShapeDtypeStruct((B, C), jnp.float32),      # aggregated logits
        ),
        grid=grid,
        in_specs=[
            pl.BlockSpec((rows, F), lambda i: (i, 0)),
            pl.BlockSpec((F, CP), lambda i: (0, 0)),   # VMEM-resident across grid
            pl.BlockSpec((1, CP), lambda i: (0, 0)),   # VMEM-resident across grid
        ],
        out_specs=(
            pl.BlockSpec((rows, C), lambda i: (i, 0)),
            pl.BlockSpec((tb, C), lambda i: (i, 0)),
        ),
        compiler_params=pltpu.CompilerParams(
            dimension_semantics=("parallel",),
            vmem_limit_bytes=vmem_limit,
        ),
    )(x2, w_p, b_p)

    return agg_logits, frame_logits2.reshape(B, N, C)


def _reference(x, w, b):
    B, N, _ = x.shape
    logits = x.reshape(B * N, -1) @ w + b                    # (B*N, C)
    sm = jax.nn.softmax(logits, axis=1)
    agg = sm.reshape(B, N, -1).mean(axis=1)                  # (B, C)
    return agg, logits.reshape(B, N, -1)


if __name__ == "__main__":
    # Small shapes consistent with the module: album batch B, clip length N,
    # feature dim F (stand-in for CUFED_VIT.NUM_FEATS), num_classes C=23.
    B, N, F, C = 2, 8, 32, 23

    key = jax.random.PRNGKey(0)
    kx, kw, kb = jax.random.split(key, 3)

    x = jax.random.normal(kx, (B, N, F), dtype=jnp.float32)

    # Deterministic nn.Linear(F, C)-style init: uniform(-1/sqrt(F), 1/sqrt(F)).
    bound = 1.0 / (F ** 0.5)
    w = jax.random.uniform(kw, (F, C), jnp.float32, -bound, bound)   # stored (F, C)
    b = jax.random.uniform(kb, (C,), jnp.float32, -bound, bound)

    # 1) Tiny batch: single grid step, full-batch blocks.
    agg1, frame1 = ftresnet_forward(x, w, b)
    jax.block_until_ready((agg1, frame1))
    ref_agg1, ref_frame1 = _reference(x, w, b)
    assert jnp.allclose(agg1, ref_agg1, atol=1e-5, rtol=1e-5)
    assert jnp.allclose(frame1, ref_frame1, atol=1e-5, rtol=1e-5)

    # 2) Multi-step grid with a ragged last block and NO batch padding:
    #    B=20, 8 albums per step -> grid of 3, last block has 4 valid albums.
    B2 = 20
    x2 = jax.random.normal(jax.random.PRNGKey(1), (B2, N, F), dtype=jnp.float32)
    agg2, frame2 = ftresnet_forward(x2, w, b, albums_per_step=8)
    jax.block_until_ready((agg2, frame2))
    ref_agg2, ref_frame2 = _reference(x2, w, b)
    assert jnp.allclose(agg2, ref_agg2, atol=1e-5, rtol=1e-5)
    assert jnp.allclose(frame2, ref_frame2, atol=1e-5, rtol=1e-5)

    # 3) Same batch with automatic tiling (auto-splits into >= 2 steps with a
    #    ragged tail so both TensorCores are exercised on v7x).
    agg3, frame3 = ftresnet_forward(x2, w, b)
    jax.block_until_ready((agg3, frame3))
    assert jnp.allclose(agg3, ref_agg2, atol=1e-5, rtol=1e-5)
    assert jnp.allclose(frame3, ref_frame2, atol=1e-5, rtol=1e-5)

    attention = None  # TODO(synk): only produced by the external TAggregate branch.
    print("KERNEL_OK")
</pallas_src>

<mosaic_0001>
module attributes {stable_mosaic.version = 11 : i64} {
  func.func @_head_softmax_agg_kernel(%arg0: i32, %arg1: memref<16x32xf32, #tpu.memory_space<vmem>>, %arg2: memref<32x128xf32, #tpu.memory_space<vmem>>, %arg3: memref<1x128xf32, #tpu.memory_space<vmem>>, %arg4: memref<16x23xf32, #tpu.memory_space<vmem>>, %arg5: memref<2x23xf32, #tpu.memory_space<vmem>>) attributes {dimension_semantics = [#tpu.dimension_semantics<parallel>], iteration_bounds = array<i64: 1>, scalar_prefetch = 0 : i64, scratch_operands = 0 : i64, tpu.core_type = #tpu.core_type<tc>, window_params = [{transform_indices = @transform_0, window_bounds = array<i64: 16, 32>}, {pipeline_mode = #tpu.pipeline_mode<synchronous>, transform_indices = @transform_1, window_bounds = array<i64: 32, 128>}, {pipeline_mode = #tpu.pipeline_mode<synchronous>, transform_indices = @transform_2, window_bounds = array<i64: 1, 128>}, {transform_indices = @transform_3, window_bounds = array<i64: 16, 23>}, {transform_indices = @transform_4, window_bounds = array<i64: 2, 23>}]} {
    %c0 = arith.constant 0 : index
    %c0_0 = arith.constant 0 : index
    %0 = vector.load %arg1[%c0, %c0_0] : memref<16x32xf32, #tpu.memory_space<vmem>>, vector<16x32xf32>
    %c0_1 = arith.constant 0 : index
    %c0_2 = arith.constant 0 : index
    %1 = vector.load %arg2[%c0_1, %c0_2] : memref<32x128xf32, #tpu.memory_space<vmem>>, vector<32x128xf32>
    %c0_3 = arith.constant 0 : index
    %c0_4 = arith.constant 0 : index
    %2 = vector.load %arg3[%c0_3, %c0_4] : memref<1x128xf32, #tpu.memory_space<vmem>>, vector<1x128xf32>
    %cst = arith.constant dense<0.000000e+00> : vector<16x128xf32>
    %3 = tpu.matmul %0, %1, %cst {dimension_numbers = #tpu.dot_dimension_numbers<[1], [0], [0], [1], [0, 0, 1, 1], [], []>} : vector<16x32xf32>, vector<32x128xf32>, vector<16x128xf32> -> vector<16x128xf32>
    %4 = vector.broadcast %2 : vector<1x128xf32> to vector<16x128xf32>
    %5 = arith.addf %3, %4 : vector<16x128xf32>
    %6 = vector.extract_strided_slice %5 {offsets = [0, 0], sizes = [16, 23], strides = [1, 1]} : vector<16x128xf32> to vector<16x23xf32>
    %c0_5 = arith.constant 0 : index
    %c0_6 = arith.constant 0 : index
    %7 = vector.load %arg4[%c0_5, %c0_6] : memref<16x23xf32, #tpu.memory_space<vmem>>, vector<16x23xf32>
    tpu.vector_store %arg4[%c0_5, %c0_6], %6 {strides = array<i32>} : memref<16x23xf32, #tpu.memory_space<vmem>>, vector<16x23xf32>,
    %cst_7 = arith.constant dense<0xFF800000> : vector<16xf32>
    %8 = vector.multi_reduction <maximumf>, %5, %cst_7 [1] : vector<16x128xf32> to vector<16xf32>
    %9 = vector.shape_cast %8 : vector<16xf32> to vector<16x1xf32>
    %10 = vector.broadcast %9 : vector<16x1xf32> to vector<16x128xf32>
    %11 = arith.subf %5, %10 : vector<16x128xf32>
    %12 = math.exp %11 : vector<16x128xf32>
    %cst_8 = arith.constant dense<0.000000e+00> : vector<16xf32>
    %13 = vector.multi_reduction <add>, %12, %cst_8 [1] : vector<16x128xf32> to vector<16xf32>
    %14 = vector.shape_cast %13 : vector<16xf32> to vector<16x1xf32>
    %15 = tpu.reciprocal %14 : vector<16x1xf32> -> vector<16x1xf32>
    %16 = vector.broadcast %15 : vector<16x1xf32> to vector<16x128xf32>
    %17 = arith.mulf %12, %16 : vector<16x128xf32>
    %18 = vector.shape_cast %17 : vector<16x128xf32> to vector<2x8x128xf32>
    %cst_9 = arith.constant dense<0.000000e+00> : vector<2x128xf32>
    %19 = vector.multi_reduction <add>, %18, %cst_9 [1] : vector<2x8x128xf32> to vector<2x128xf32>
    %cst_10 = arith.constant 1.250000e-01 : f32
    %20 = vector.broadcast %cst_10 : f32 to vector<2x128xf32>
    %21 = arith.mulf %19, %20 : vector<2x128xf32>
    %22 = vector.extract_strided_slice %21 {offsets = [0, 0], sizes = [2, 23], strides = [1, 1]} : vector<2x128xf32> to vector<2x23xf32>
    %c0_11 = arith.constant 0 : index
    %c0_12 = arith.constant 0 : index
    %23 = vector.load %arg5[%c0_11, %c0_12] : memref<2x23xf32, #tpu.memory_space<vmem>>, vector<2x23xf32>
    tpu.vector_store %arg5[%c0_11, %c0_12], %22 {strides = array<i32>} : memref<2x23xf32, #tpu.memory_space<vmem>>, vector<2x23xf32>,
    return
  }
  func.func @transform_0(%arg0: i32) -> (i32, i32) {
    %c0_i32 = arith.constant 0 : i32
    %c0_i32_0 = arith.constant 0 : i32
    return %arg0, %c0_i32 : i32, i32
  }
  func.func @transform_1(%arg0: i32) -> (i32, i32) {
    %c0_i32 = arith.constant 0 : i32
    %c0_i32_0 = arith.constant 0 : i32
    %c0_i32_1 = arith.constant 0 : i32
    return %c0_i32, %c0_i32_0 : i32, i32
  }
  func.func @transform_2(%arg0: i32) -> (i32, i32) {
    %c0_i32 = arith.constant 0 : i32
    %c0_i32_0 = arith.constant 0 : i32
    %c0_i32_1 = arith.constant 0 : i32
    return %c0_i32, %c0_i32_0 : i32, i32
  }
  func.func @transform_3(%arg0: i32) -> (i32, i32) {
    %c0_i32 = arith.constant 0 : i32
    %c0_i32_0 = arith.constant 0 : i32
    return %arg0, %c0_i32 : i32, i32
  }
  func.func @transform_4(%arg0: i32) -> (i32, i32) {
    %c0_i32 = arith.constant 0 : i32
    %c0_i32_0 = arith.constant 0 : i32
    return %arg0, %c0_i32 : i32, i32
  }
}

</mosaic_0001>

<llo_original>
// kernel: tpu_custom_call.1
$region0: #{tpu_custom_call.1}
  #allocation0 [shape = 'u32[]', space=smem, size = 0x4, offset = 0x4, fixed_abs, tag = 'smem constant byte address 0x4 - core index']
  #allocation1 [shape = 'u32[144,128]{1,0:T(1,128)}', space=vmem, size = 0x12000, scoped, tag = 'internal scratch']
  %s0 = inlined_call_operand.hbm [shape: f32[16,32], index: 0, kind: input, shape index: {}]
  %s1 = inlined_call_operand.hbm [shape: f32[32,128], index: 1, kind: input, shape index: {}]
  %s2 = inlined_call_operand.vmem [shape: f32[1,128], index: 2, kind: input, shape index: {}]
  %s3 = inlined_call_operand.hbm [shape: f32[16,23], index: 3, kind: output, shape index: {0}]
  %s4 = inlined_call_operand.hbm [shape: f32[2,23], index: 4, kind: output, shape index: {1}]
  %5 = xla_tuple %s3, %s4
  %s6 = sld [smem:[#allocation0]]
  $region38: #{tpu_custom_call.1} parent=0
    _
  %s8 = ssub.s32 1, %s6
  %s9 = scalar_select 0, %s8, %s6
  $region1: #{tpu_custom_call.1} parent=0
    #allocation2 [shape = 'u8[8192]{0}', space=vmem, size = 0x2000, scoped, tag = 'input window, operand 0, single buffered']
    #allocation3 [shape = 's32[1]{0}', space=sflag, size = 0x4, scoped, tag = 'scoped memory for tpu_custom_call.1']
    #allocation4 [shape = 's32[1]{0}', space=sflag, size = 0x4, scoped, tag = 'scoped memory for tpu_custom_call.1']
    #allocation5 [shape = 'u8[16384]{0}', space=vmem, size = 0x4000, scoped, tag = 'input window, operand 1, single buffered']
    #allocation6 [shape = 's32[1]{0}', space=sflag, size = 0x4, scoped, tag = 'scoped memory for tpu_custom_call.1']
    #allocation7 [shape = 'u8[8192]{0}', space=vmem, size = 0x2000, scoped, tag = 'output window, operand 0, single buffered']
    #allocation8 [shape = 'u8[1024]{0}', space=vmem, size = 0x400, scoped, tag = 'output window, operand 1, single buffered']
    #allocation9 [shape = 's32[1]{0}', space=sflag, size = 0x4, scoped, tag = 'scoped memory for tpu_custom_call.1']
    %10 = vsyncpa [#allocation3], 0
    %11 = vsyncpa [#allocation6], 0
    %12 = vsyncpa [#allocation4], 0
    %13 = vsyncpa [#allocation9], 0
    // Predicated region
    $region2: #{tpu_custom_call.1} parent=1 // pred_check
      _
    $region3: #{tpu_custom_call.1} parent=1 // pred_check_branch
      %15 = sbr.rel (0) target = $region5
    $region4: #{tpu_custom_call.1} parent=1 // pred_region
      %s17 = ssub.s32 256, 256
      %18 = vsyncadd [#allocation3], %s17
      %s19 = sshll.u32 [#allocation2], 4
      %s20 = int_to_ptr.vmem [resolvable:$true] %s19
      %25 = dma.hbm_to_vmem [thread:$0]  %s0, 256, %s20, [#allocation3], 128, 128, 8
    $region5: #{tpu_custom_call.1} parent=1 // pred_fallthru
      _
    // Predicated region
    $region6: #{tpu_custom_call.1} parent=1 // pred_check
      _
    $region7: #{tpu_custom_call.1} parent=1 // pred_check_branch
      %27 = sbr.rel (0) target = $region9
    $region8: #{tpu_custom_call.1} parent=1 // pred_region
      %s29 = ssub.s32 512, 512
      %30 = vsyncadd [#allocation6], %s29
      %s31 = sshll.u32 [#allocation5], 4
      %s32 = int_to_ptr.vmem [resolvable:$true] %s31
      %37 = dma.hbm_to_vmem [thread:$0]  %s1, 512, %s32, [#allocation6], 128, 128, 8
    $region9: #{tpu_custom_call.1} parent=1 // pred_fallthru
      _
    // Predicated region
    $region10: #{tpu_custom_call.1} parent=1 // pred_check
      _
    $region11: #{tpu_custom_call.1} parent=1 // pred_check_branch
      %39 = sbr.rel (0) target = $region13
    $region12: #{tpu_custom_call.1} parent=1 // pred_region
      _
    $region13: #{tpu_custom_call.1} parent=1 // pred_fallthru
      _
    // Predicated region
    $region14: #{tpu_custom_call.1} parent=1 // pred_check
      _
    $region15: #{tpu_custom_call.1} parent=1 // pred_check_branch
      %41 = sbr.rel (0) target = $region17
    $region16: #{tpu_custom_call.1} parent=1 // pred_region
      %42 = dma.done [#allocation3], 256
    $region17: #{tpu_custom_call.1} parent=1 // pred_fallthru
      _
    // Predicated region
    $region18: #{tpu_custom_call.1} parent=1 // pred_check
      _
    $region19: #{tpu_custom_call.1} parent=1 // pred_check_branch
      %44 = sbr.rel (0) target = $region21
    $region20: #{tpu_custom_call.1} parent=1 // pred_region
      %45 = dma.done [#allocation6], 512
    $region21: #{tpu_custom_call.1} parent=1 // pred_fallthru
      _
    %v46 = vld [vmem:[#allocation2] sm:$0xff]
    %v47 = vld [vmem:[#allocation2 + $0x8] sm:$0xff]
    %v48 = vld [vmem:[#allocation5] sm:$0xff]
    %v49 = vld [vmem:[#allocation5 + $0x8] sm:$0xff]
    %v50 = vld [vmem:[#allocation5 + $0x10] sm:$0xff]
    %v51 = vld [vmem:[#allocation5 + $0x18] sm:$0xff]
    %v52 = vld [vmem:[%s2] sm:$0x1]
    %v54 = vlaneseq
    %v55 = vshrl.u32 %v54, 7
    %v56 = vsub.s32 0, %v55
    %v57 = vrot.slane %v52, %v56
    %vm59 = vcmask 261120
    %v61 = vsel %vm59, %v46, 0
    %v64 = vsel %vm59, %v47, 0
    %66 = vmatprep.subr.mxu0 0.0
    %67 = vmatpush1.msra.mxu0 %v48
    %68 = vmatprep.subr.mxu0 0.0
    %69 = vmatpush1.msra.mxu0 %v49
    %70 = vmatprep.subr.mxu0 0.0
    %71 = vmatpush1.msra.mxu0 %v50
    %72 = vmatprep.subr.mxu0 0.0
    %73 = vmatpush1.msra.mxu0 %v51
    %74 = vmatprep.subr.mxu0 0.0
    %75 = vmatpush1.msra.mxu0 0.0
    %76 = vmatprep.subr.mxu0 0.0
    %77 = vmatpush1.msra.mxu0 0.0
    %78 = vmatprep.subr.mxu0 0.0
    %79 = vmatpush1.msra.mxu0 0.0
    %80 = vmatprep.subr.mxu0 0.0
    %81 = vmatpush1.msra.mxu0 0.0
    %82 = vmatprep.subr.mxu0 0.0
    %83 = vmatpush1.msra.mxu0 0.0
    %84 = vmatprep.subr.mxu0 0.0
    %85 = vmatpush1.msra.mxu0 0.0
    %86 = vmatprep.subr.mxu0 0.0
    %87 = vmatpush1.msra.mxu0 0.0
    %88 = vmatprep.subr.mxu0 0.0
    %89 = vmatpush1.msra.mxu0 0.0
    %90 = vmatprep.subr.mxu0 0.0
    %91 = vmatpush1.msra.mxu0 0.0
    %92 = vmatprep.subr.mxu0 0.0
    %93 = vmatpush1.msra.mxu0 0.0
    %94 = vmatprep.subr.mxu0 0.0
    %95 = vmatpush1.msra.mxu0 0.0
    %96 = vmatprep.subr.mxu0 0.0
    %97 = vmatpush1.msra.mxu0 0.0
    %98 = vmatprep.subr.mxu0 0.0
    %99 = vmatpush1.msra.mxu0 0.0
    %100 = vmatprep.subr.mxu0 0.0
    %101 = vmatpush1.msra.mxu0 0.0
    %102 = vmatprep.subr.mxu0 0.0
    %103 = vmatpush1.msra.mxu0 0.0
    %104 = vmatprep.subr.mxu0 0.0
    %105 = vmatpush1.msra.mxu0 0.0
    %106 = vmatprep.subr.mxu0 0.0
    %107 = vmatpush1.msra.mxu0 0.0
    %108 = vmatprep.subr.mxu0 0.0
    %109 = vmatpush1.msra.mxu0 0.0
    %110 = vmatprep.subr.mxu0 0.0
    %111 = vmatpush1.msra.mxu0 0.0
    %112 = vmatprep.subr.mxu0 0.0
    %113 = vmatpush1.msra.mxu0 0.0
    %114 = vmatprep.subr.mxu0 0.0
    %115 = vmatpush1.msra.mxu0 0.0
    %116 = vmatprep.subr.mxu0 0.0
    %117 = vmatpush1.msra.mxu0 0.0
    %118 = vmatprep.subr.mxu0 0.0
    %119 = vmatpush1.msra.mxu0 0.0
    %120 = vmatprep.subr.mxu0 0.0
    %121 = vmatpush1.msra.mxu0 0.0
    %122 = vmatprep.subr.mxu0 0.0
    %123 = vmatpush1.msra.mxu0 0.0
    %124 = vmatprep.subr.mxu0 0.0
    %125 = vmatpush1.msra.mxu0 0.0
    %126 = vmatprep.subr.mxu0 0.0
    %127 = vmatpush1.msra.mxu0 0.0
    %128 = vmatprep.subr.mxu0 0.0
    %129 = vmatpush1.msra.mxu0 0.0
    %130 = vmatprep.mubr.f32.mxu0 0.0
    %131 = vmatmul.mubr.f32.gmra.mrb[0].mxu0 %v61
    %v132 = vpop.f32.mrb[0].mxu0
    %v133 = vadd.f32 %v57, %v132
    %v134 = vpop.f32.mrb[0].mxu0
    %135 = vmatprep.mubr.f32.mxu0 0.0
    %136 = vmatmul.mubr.f32.gmra.mrb[0].mxu0 %v64
    %v137 = vpop.f32.mrb[0].mxu0
    %v138 = vadd.f32 %v57, %v137
    %v139 = vpop.f32.mrb[0].mxu0
    %140 = vdwg.mxu0
    %vm141 = vcmask 187392
    %142 = vst.msk [vmem:[#allocation7] sm:$0xff] %vm141, %v133
    %143 = vst.msk [vmem:[#allocation7 + $0x8] sm:$0xff] %vm141, %v138
    %144 = vmax.xlane.f32.xlu0 %v133
    %v145 = vpop.xlane.xlu0 %144
    %146 = vmax.xlane.f32.xlu0 %v138
    %v147 = vpop.xlane.xlu0 %146
    %v148 = vsub.f32 %v133, %v145
    %v149 = vsub.f32 %v138, %v147
    %v150 = vmul.f32 %v148, 1.442695
    %v151 = vpow.pop %v150
    %v152 = vmul.f32 %v149, 1.442695
    %v153 = vpow.pop %v152
    %154 = vadd.xlane.f32.xlu0 %v151
    %v155 = vpop.xlane.xlu0 %154
    %156 = vadd.xlane.f32.xlu0 %v153
    %v157 = vpop.xlane.xlu0 %156
    %v158 = vrcp.pop %v155
    %v159 = vrcp.pop %v157
    %v160 = vmul.f32 %v151, %v158
    %v161 = vmul.f32 %v153, %v159
    %v162 = vrot.slane %v160, 4
    %v163 = vadd.f32 %v160, %v162
    %v164 = vrot.slane %v163, 2
    %v165 = vadd.f32 %v163, %v164
    %v166 = vrot.slane %v165, 1
    %v167 = vadd.f32 %v165, %v166
    %v168 = vrot.slane %v161, 4
    %v169 = vadd.f32 %v161, %v168
    %v170 = vrot.slane %v169, 2
    %v171 = vadd.f32 %v169, %v170
    %v172 = vrot.slane %v171, 1
    %v173 = vadd.f32 %v171, %v172
    %v174 = vmul.f32 %v167, 0.125
    %v175 = vmul.f32 %v173, 0.125
    %vm178 = vcmask 1041409
    %v179 = vsel %vm178, %v175, %v174
    %vm181 = vcmask 181248
    %182 = vst.msk [vmem:[#allocation8] sm:$0x3] %vm181, %v179
    // Predicated region
    $region22: #{tpu_custom_call.1} parent=1 // pred_check
      _
    $region23: #{tpu_custom_call.1} parent=1 // pred_check_branch
      %184 = sbr.rel (0) target = $region25
    $region24: #{tpu_custom_call.1} parent=1 // pred_region
      %s186 = ssub.s32 256, 256
      %187 = vsyncadd [#allocation4], %s186
      %s188 = sshll.u32 [#allocation7], 4
      %s189 = int_to_ptr.vmem [resolvable:$true] %s188
      %194 = dma.vmem_to_hbm [thread:$0]  %s189, 256, %s3, [#allocation4], 128, 128, 8
    $region25: #{tpu_custom_call.1} parent=1 // pred_fallthru
      _
    // Predicated region
    $region26: #{tpu_custom_call.1} parent=1 // pred_check
      _
    $region27: #{tpu_custom_call.1} parent=1 // pred_check_branch
      %196 = sbr.rel (0) target = $region29
    $region28: #{tpu_custom_call.1} parent=1 // pred_region
      %s198 = ssub.s32 32, 32
      %199 = vsyncadd [#allocation9], %s198
      %s201 = sshll.u32 [#allocation8], 4
      %s202 = int_to_ptr.vmem [resolvable:$true] %s201
      %204 = dma.vmem_to_hbm [thread:$0]  %s202, 32, %s4, [#allocation9]
    $region29: #{tpu_custom_call.1} parent=1 // pred_fallthru
      _
    // Predicated region
    $region30: #{tpu_custom_call.1} parent=1 // pred_check
      _
    $region31: #{tpu_custom_call.1} parent=1 // pred_check_branch
      %206 = sbr.rel (0) target = $region33
    $region32: #{tpu_custom_call.1} parent=1 // pred_region
      %207 = dma.done [#allocation4], 256
    $region33: #{tpu_custom_call.1} parent=1 // pred_fallthru
      _
    // Predicated region
    $region34: #{tpu_custom_call.1} parent=1 // pred_check
      _
    $region35: #{tpu_custom_call.1} parent=1 // pred_check_branch
      %209 = sbr.rel (0) target = $region37
    $region36: #{tpu_custom_call.1} parent=1 // pred_region
      %210 = dma.done [#allocation9], 32
    $region37: #{tpu_custom_call.1} parent=1 // pred_fallthru
      _
    %211 = vsyncpa [#allocation3], 1
    %212 = vsyncpa [#allocation6], 1
    %213 = vsyncpa [#allocation4], 1
    %214 = vsyncpa [#allocation9], 1

</llo_original>
